<compile_context>
chip_gen: v7x
topology: tpu7x:2x2x1
jax: 0.10.0
libtpu: 0.0.40
codegen_flags: <defaults>
</compile_context>

<pallas_src>
import jax
import jax.numpy as jnp
from jax import lax
from jax.experimental import pallas as pl
from jax.experimental.pallas import tpu as pltpu

_EPS = 1e-5  # CLIP layer_norm_eps


def _layer_norm(x, g, b):
    mu = jnp.mean(x, axis=-1, keepdims=True)
    var = jnp.mean(jnp.square(x - mu), axis=-1, keepdims=True)
    return (x - mu) * lax.rsqrt(var + _EPS) * g + b


# ------------------------------ embedding kernel ------------------------------

def _embed_call(tokens_col, tok_emb, pos_emb, B, T, V, D):
    """x[b] = one_hot(tokens[b]) @ token_embedding + position_embedding (grid over B)."""
    # TODO(synk): at real CLIP vocab (49408) replace the one-hot MXU matmul with a
    # scalar-prefetched per-row gather (pl.Element(1) BlockSpec) or manual DMA gather.
    def kernel(tok_ref, temb_ref, pemb_ref, o_ref):
        tok = tok_ref[...]                                          # (T, 1) int32
        iota = lax.broadcasted_iota(jnp.int32, (T, V), 1)
        onehot = jnp.where(iota == tok, 1.0, 0.0).astype(jnp.bfloat16)
        x = jnp.dot(onehot, temb_ref[...], preferred_element_type=jnp.float32)
        o_ref[...] = x + pemb_ref[...]                              # broadcast pos add

    return pl.pallas_call(
        kernel,
        out_shape=jax.ShapeDtypeStruct((B * T, D), jnp.float32),
        grid_spec=pltpu.PrefetchScalarGridSpec(
            num_scalar_prefetch=0,
            grid=(B,),
            in_specs=[
                pl.BlockSpec((T, 1), lambda b: (b, 0)),
                pl.BlockSpec((V, D), lambda b: (0, 0)),
                pl.BlockSpec((T, D), lambda b: (0, 0)),
            ],
            out_specs=pl.BlockSpec((T, D), lambda b: (b, 0)),
        ),
        compiler_params=pltpu.CompilerParams(dimension_semantics=("parallel",)),
    )(tokens_col, tok_emb, pos_emb)


# ------------------- fused encoder kernel: grid = (B, layers) -------------------

def _encoder_call(x_emb, stk, lnf_g, lnf_b, *, B, T, D, H, n_layers, apply_final_ln):
    Dh = D // H

    def kernel(x_ref, ln1g, ln1b, wqkv, bqkv, wout, bout, ln2g, ln2b,
               wfc, bfc, wpr, bpr, lnfg, lnfb, o_ref, acc_ref, attn_ref):
        l = pl.program_id(1)

        @pl.when(l == 0)
        def _():
            acc_ref[...] = x_ref[...]          # load embedding into resident residual

        x = acc_ref[...]                                            # (T, D) f32

        # ---- LN1 + fused QKV projection (1/sqrt(Dh) already folded into Wq/bq) ----
        h = _layer_norm(x, ln1g[0], ln1b[0])
        qkv = jnp.dot(h.astype(jnp.bfloat16), wqkv[0],
                      preferred_element_type=jnp.float32) + bqkv[0]
        qkv_b = qkv.astype(jnp.bfloat16)       # single bf16 cast, reused by every head

        # ---- causal multi-head attention; head outputs written to VMEM scratch ----
        rows = lax.broadcasted_iota(jnp.int32, (T, T), 0)
        cols = lax.broadcasted_iota(jnp.int32, (T, T), 1)
        causal = cols <= rows
        neg = jnp.finfo(jnp.float32).min       # dtype-aware mask fill
        for hd in range(H):                    # static unroll over heads, no concats
            c0 = hd * Dh
            qh = qkv_b[:, c0:c0 + Dh]
            kh = qkv_b[:, D + c0:D + c0 + Dh]
            vh = qkv_b[:, 2 * D + c0:2 * D + c0 + Dh]
            # q @ k^T without materializing a transpose:
            s = lax.dot_general(qh, kh, (((1,), (1,)), ((), ())),
                                preferred_element_type=jnp.float32)
            s = jnp.where(causal, s, neg)
            s = s - jnp.max(s, axis=-1, keepdims=True)
            e = jnp.exp(s)
            p = e * pl.reciprocal(jnp.sum(e, axis=-1, keepdims=True), approx=True)
            attn_ref[:, c0:c0 + Dh] = jnp.dot(p.astype(jnp.bfloat16), vh,
                                              preferred_element_type=jnp.float32)

        # ---- attention out-projection + residual ----
        x2 = jnp.dot(attn_ref[...].astype(jnp.bfloat16), wout[0],
                     preferred_element_type=jnp.float32) + bout[0] + x

        # ---- LN2 + MLP (QuickGELU, f32) + residual ----
        h2 = _layer_norm(x2, ln2g[0], ln2b[0])
        g = jnp.dot(h2.astype(jnp.bfloat16), wfc[0],
                    preferred_element_type=jnp.float32) + bfc[0]
        g = g * jax.nn.sigmoid(1.702 * g)
        y = jnp.dot(g.astype(jnp.bfloat16), wpr[0],
                    preferred_element_type=jnp.float32) + bpr[0] + x2
        acc_ref[...] = y

        @pl.when(l == pl.num_programs(1) - 1)
        def _():
            if apply_final_ln:                 # static Python flag (trace-time)
                o_ref[...] = _layer_norm(y, lnfg[...], lnfb[...])
            else:
                o_ref[...] = y

    def wspec(*shape):
        return pl.BlockSpec((1,) + shape, lambda b, l: (l, 0, 0))

    return pl.pallas_call(
        kernel,
        out_shape=jax.ShapeDtypeStruct((B * T, D), jnp.float32),
        grid_spec=pltpu.PrefetchScalarGridSpec(
            num_scalar_prefetch=0,
            grid=(B, n_layers),
            in_specs=[
                pl.BlockSpec((T, D), lambda b, l: (b, 0)),          # embeddings
                wspec(1, D), wspec(1, D),                           # ln1 gamma / beta
                wspec(D, 3 * D), wspec(1, 3 * D),                   # w_qkv / b_qkv
                wspec(D, D), wspec(1, D),                           # w_out / b_out
                wspec(1, D), wspec(1, D),                           # ln2 gamma / beta
                wspec(D, 4 * D), wspec(1, 4 * D),                   # w_fc / b_fc
                wspec(4 * D, D), wspec(1, D),                       # w_pr / b_pr
                pl.BlockSpec((1, D), lambda b, l: (0, 0)),          # final LN gamma
                pl.BlockSpec((1, D), lambda b, l: (0, 0)),          # final LN beta
            ],
            out_specs=pl.BlockSpec((T, D), lambda b, l: (b, 0)),    # resident across l
            scratch_shapes=[pltpu.VMEM((T, D), jnp.float32),        # residual stream
                            pltpu.VMEM((T, D), jnp.float32)],       # attention heads
        ),
        compiler_params=pltpu.CompilerParams(
            dimension_semantics=("parallel", "arbitrary"),
            vmem_limit_bytes=32 * 1024 * 1024),
    )(x_emb, stk["ln1_g"], stk["ln1_b"], stk["w_qkv"], stk["b_qkv"],
      stk["w_out"], stk["b_out"], stk["ln2_g"], stk["ln2_b"],
      stk["w_fc"], stk["b_fc"], stk["w_pr"], stk["b_pr"], lnf_g, lnf_b)


# --------------------------------- the embedder ---------------------------------

class FrozenCLIPEmbedderPallas:
    """CLIP text encoder (FrozenCLIPEmbedder semantics) with synthetic weights."""
    LAYERS = ["last", "pooled", "hidden"]
    PAD_ID, BOS_ID, EOS_ID = 0, 1, 2

    def __init__(self, key, vocab_size=128, max_length=16, width=256,
                 layers=2, heads=2, layer="last", layer_idx=None):
        assert layer in self.LAYERS
        assert width % heads == 0
        if layer == "hidden":
            assert layer_idx is not None
            assert 0 <= abs(layer_idx) <= layers
        self.vocab_size, self.max_length = vocab_size, max_length
        self.width, self.layers, self.heads = width, layers, heads
        self.layer, self.layer_idx = layer, layer_idx

        D = width
        Dh = D // heads
        scale = 1.0 / float(Dh) ** 0.5
        keys = iter(jax.random.split(key, 2 + 8 * layers))

        def w(k, shape):   # pre-transposed (in, out) layout
            return 0.02 * jax.random.normal(k, shape, jnp.float32)

        def bias(k, n):
            return 0.01 * jax.random.normal(k, (1, n), jnp.float32)

        self.tok_emb = (0.02 * jax.random.normal(next(keys), (vocab_size, D),
                                                 jnp.float32)).astype(jnp.bfloat16)
        self.pos_emb = 0.01 * jax.random.normal(next(keys), (max_length, D), jnp.float32)

        w_qkv, b_qkv, w_out, b_out, w_fc, b_fc, w_pr, b_pr = ([] for _ in range(8))
        for _ in range(layers):
            wq = w(next(keys), (D, 3 * D))
            bq = bias(next(keys), 3 * D)
            # fold 1/sqrt(Dh) into the Q columns (weights are frozen)
            wq = wq.at[:, :D].multiply(scale)
            bq = bq.at[:, :D].multiply(scale)
            w_qkv.append(wq); b_qkv.append(bq)
            w_out.append(w(next(keys), (D, D)));       b_out.append(bias(next(keys), D))
            w_fc.append(w(next(keys), (D, 4 * D)));    b_fc.append(bias(next(keys), 4 * D))
            w_pr.append(w(next(keys), (4 * D, D)));    b_pr.append(bias(next(keys), D))

        # stacked (L, ...) layouts so one fused pallas_call can grid over layers
        self.stk = dict(
            ln1_g=jnp.ones((layers, 1, D), jnp.float32),
            ln1_b=jnp.zeros((layers, 1, D), jnp.float32),
            w_qkv=jnp.stack(w_qkv).astype(jnp.bfloat16),
            b_qkv=jnp.stack(b_qkv),
            w_out=jnp.stack(w_out).astype(jnp.bfloat16),
            b_out=jnp.stack(b_out),
            ln2_g=jnp.ones((layers, 1, D), jnp.float32),
            ln2_b=jnp.zeros((layers, 1, D), jnp.float32),
            w_fc=jnp.stack(w_fc).astype(jnp.bfloat16),
            b_fc=jnp.stack(b_fc),
            w_pr=jnp.stack(w_pr).astype(jnp.bfloat16),
            b_pr=jnp.stack(b_pr),
        )
        self.lnf_g = jnp.ones((1, D), jnp.float32)
        self.lnf_b = jnp.zeros((1, D), jnp.float32)

    # weights are frozen (inference only); mirrors FrozenCLIPEmbedder.freeze()
    def freeze(self):
        return self

    def tokenize(self, texts):
        # TODO(synk): the real module uses the HF CLIPTokenizer (BPE merges file);
        # this is a deterministic byte-level stub with the same truncate/pad rules.
        ids = []
        for t in texts:
            body = [3 + (b % (self.vocab_size - 3)) for b in t.encode("utf-8")]
            body = body[: self.max_length - 2]
            row = [self.BOS_ID] + body + [self.EOS_ID]
            row += [self.PAD_ID] * (self.max_length - len(row))
            ids.append(row)
        return jnp.asarray(ids, dtype=jnp.int32)

    def encode_tokens(self, tokens):
        B, T = tokens.shape
        assert T == self.max_length
        D, H, L = self.width, self.heads, self.layers

        x = _embed_call(tokens.reshape(B * T, 1), self.tok_emb, self.pos_emb,
                        B, T, self.vocab_size, D)                    # (B*T, D)

        if self.layer == "hidden":
            # HF hidden_states are pre-final-LN; index 0 is the embedding output.
            idx = self.layer_idx
            n = idx if idx >= 0 else L + 1 + idx
            if n == 0:
                return x.reshape(B, T, D)
            z = _encoder_call(x, self.stk, self.lnf_g, self.lnf_b,
                              B=B, T=T, D=D, H=H, n_layers=n, apply_final_ln=False)
            return z.reshape(B, T, D)

        z = _encoder_call(x, self.stk, self.lnf_g, self.lnf_b,
                          B=B, T=T, D=D, H=H, n_layers=L, apply_final_ln=True)
        last = z.reshape(B, T, D)
        if self.layer == "last":
            return last
        # 'pooled': hidden state at the EOS token, [:, None, :]
        eos_pos = jnp.argmax((tokens == self.EOS_ID).astype(jnp.int32), axis=-1)
        return last[jnp.arange(B), eos_pos][:, None, :]

    def __call__(self, text):
        tokens = text if isinstance(text, jnp.ndarray) else self.tokenize(text)
        return self.encode_tokens(tokens)

    def encode(self, text):
        return self(text)


if __name__ == "__main__":
    key = jax.random.PRNGKey(0)
    model = FrozenCLIPEmbedderPallas(key, vocab_size=128, max_length=16,
                                     width=256, layers=2, heads=2, layer="last")
    text = ["a photograph of an astronaut riding a horse",
            "a painting of a cat"]
    z = model(text)
    z = jax.block_until_ready(z)
    assert z.shape == (2, 16, 256) and z.dtype == jnp.float32
    assert bool(jnp.all(jnp.isfinite(z)))
    print("KERNEL_OK")
</pallas_src>

<mosaic_0001>
module attributes {stable_mosaic.version = 11 : i64} {
  func.func @kernel(%arg0: i32, %arg1: memref<16x1xi32, #tpu.memory_space<vmem>>, %arg2: memref<128x256xbf16, #tpu.memory_space<vmem>>, %arg3: memref<16x256xf32, #tpu.memory_space<vmem>>, %arg4: memref<16x256xf32, #tpu.memory_space<vmem>>) attributes {dimension_semantics = [#tpu.dimension_semantics<parallel>], iteration_bounds = array<i64: 2>, scalar_prefetch = 0 : i64, scratch_operands = 0 : i64, tpu.core_type = #tpu.core_type<tc>, window_params = [{transform_indices = @transform_0, window_bounds = array<i64: 16, 1>}, {pipeline_mode = #tpu.pipeline_mode<synchronous>, transform_indices = @transform_1, window_bounds = array<i64: 128, 256>}, {pipeline_mode = #tpu.pipeline_mode<synchronous>, transform_indices = @transform_2, window_bounds = array<i64: 16, 256>}, {transform_indices = @transform_3, window_bounds = array<i64: 16, 256>}]} {
    %c0 = arith.constant 0 : index
    %c0_0 = arith.constant 0 : index
    %0 = vector.load %arg1[%c0, %c0_0] : memref<16x1xi32, #tpu.memory_space<vmem>>, vector<16x1xi32>
    %1 = tpu.iota {dimensions = array<i32: 1>} : vector<16x128xi32>
    %2 = vector.broadcast %0 : vector<16x1xi32> to vector<16x128xi32>
    %3 = arith.cmpi eq, %1, %2 : vector<16x128xi32>
    %cst = arith.constant 1.000000e+00 : f32
    %cst_1 = arith.constant 0.000000e+00 : f32
    %4 = vector.broadcast %cst : f32 to vector<16x128xf32>
    %5 = vector.broadcast %cst_1 : f32 to vector<16x128xf32>
    %6 = arith.select %3, %4, %5 : vector<16x128xi1>, vector<16x128xf32>
    %7 = arith.truncf %6 : vector<16x128xf32> to vector<16x128xbf16>
    %c0_2 = arith.constant 0 : index
    %c0_3 = arith.constant 0 : index
    %8 = vector.load %arg2[%c0_2, %c0_3] : memref<128x256xbf16, #tpu.memory_space<vmem>>, vector<128x256xbf16>
    %cst_4 = arith.constant dense<0.000000e+00> : vector<16x256xf32>
    %9 = tpu.matmul %7, %8, %cst_4 {dimension_numbers = #tpu.dot_dimension_numbers<[1], [0], [0], [1], [0, 0, 1, 1], [], []>} : vector<16x128xbf16>, vector<128x256xbf16>, vector<16x256xf32> -> vector<16x256xf32>
    %c0_5 = arith.constant 0 : index
    %c0_6 = arith.constant 0 : index
    %10 = vector.load %arg3[%c0_5, %c0_6] : memref<16x256xf32, #tpu.memory_space<vmem>>, vector<16x256xf32>
    %11 = arith.addf %9, %10 : vector<16x256xf32>
    %c0_7 = arith.constant 0 : index
    %c0_8 = arith.constant 0 : index
    %12 = vector.load %arg4[%c0_7, %c0_8] : memref<16x256xf32, #tpu.memory_space<vmem>>, vector<16x256xf32>
    tpu.vector_store %arg4[%c0_7, %c0_8], %11 {strides = array<i32>} : memref<16x256xf32, #tpu.memory_space<vmem>>, vector<16x256xf32>,
    return
  }
  func.func @transform_0(%arg0: i32) -> (i32, i32) {
    %c0_i32 = arith.constant 0 : i32
    %c0_i32_0 = arith.constant 0 : i32
    return %arg0, %c0_i32 : i32, i32
  }
  func.func @transform_1(%arg0: i32) -> (i32, i32) {
    %c0_i32 = arith.constant 0 : i32
    %c0_i32_0 = arith.constant 0 : i32
    %c0_i32_1 = arith.constant 0 : i32
    return %c0_i32, %c0_i32_0 : i32, i32
  }
  func.func @transform_2(%arg0: i32) -> (i32, i32) {
    %c0_i32 = arith.constant 0 : i32
    %c0_i32_0 = arith.constant 0 : i32
    %c0_i32_1 = arith.constant 0 : i32
    return %c0_i32, %c0_i32_0 : i32, i32
  }
  func.func @transform_3(%arg0: i32) -> (i32, i32) {
    %c0_i32 = arith.constant 0 : i32
    %c0_i32_0 = arith.constant 0 : i32
    return %arg0, %c0_i32 : i32, i32
  }
}

</mosaic_0001>

<llo_original>
// kernel: tpu_custom_call.1
$region0: #{tpu_custom_call.1}
  #allocation0 [shape = 'u32[]', space=smem, size = 0x4, offset = 0x4, fixed_abs, tag = 'smem constant byte address 0x4 - core index']
  #allocation1 [shape = 'u32[144,128]{1,0:T(1,128)}', space=vmem, size = 0x12000, scoped, tag = 'internal scratch']
  %s0 = inlined_call_operand.vmem [shape: s32[32,1], index: 0, kind: input, shape index: {}]
  %s1 = inlined_call_operand.hbm [shape: bf16[128,256], index: 1, kind: input, shape index: {}]
  %s2 = inlined_call_operand.vmem [shape: f32[16,256], index: 2, kind: input, shape index: {}]
  %s3 = inlined_call_operand.hbm [shape: f32[32,256], index: 3, kind: output, shape index: {}]
  %s4 = sld [smem:[#allocation0]]
  $region49: #{tpu_custom_call.1} parent=0
    _
  %s6 = ssub.s32 1, %s4
  %s7 = scalar_select 0, %s6, %s4
  $region1: #{tpu_custom_call.1} parent=0
    #allocation2 [shape = 'u8[65536]{0}', space=vmem, size = 0x10000, scoped, tag = 'input window, operand 1, single buffered']
    #allocation3 [shape = 's32[2]{0}', space=sflag, size = 0x8, scoped, tag = 'scoped memory for tpu_custom_call.1']
    #allocation4 [shape = 's32[2]{0}', space=sflag, size = 0x8, scoped, tag = 'scoped memory for tpu_custom_call.1']
    #allocation5 [shape = 'u8[32768]{0}', space=vmem, size = 0x8000, scoped, tag = 'output window, operand 0']
    %8 = vsyncpa [#allocation3], 0
    %9 = vsyncpa [#allocation4], 0
    %s10 = scalar_lea.sflag [#allocation4], 1
    %11 = vsyncpa %s10, 0
    loop: start=0, step=1, limit=4
    $region2: #{tpu_custom_call.1} parent=1 // loop_pre_header
      _
    $region3: #{tpu_custom_call.1} parent=1 // loop_header
      %s13 = sphi 0, %s17
      %p14 = scmp.ge.s32.totalorder %s13, 4
      %s23 = sphi 0, %s25
      %s26 = sphi 0, %s23
      %s27 = sphi 0, %s26
      %s43 = sphi 0, %s27
      %s47 = sphi 0, %s47
      %s49 = sphi 0, %s47
      %s50 = sphi 0, %s49
      %s64 = sphi 0, %s50
      %s68 = sphi 0, %s68
      %s70 = sphi 0, %s68
      %s71 = sphi 0, %s70
      %s85 = sphi 0, %s71
      %s91 = sphi 0, %s93
      %s94 = sphi 0, %s91
      %s95 = sphi 0, %s94
      %s111 = sphi 0, %s95
    $region4: #{tpu_custom_call.1} parent=1 // loop_header_branch
      %16 = sbr.rel (%p14) target = $region8
    $region5: #{tpu_custom_call.1} parent=1 // loop_body
      %s18 = ssub.s32 %s13, 1
      %s19 = ssub.s32 %s13, 2
      %s20 = sadd.s32 %s13, 1
      %s21 = ssub.s32 %s13, %s20
      %p22 = scmp.eq.s32.totalorder %s21, 0
      %s24 = sadd.s32 %s23, 1
      %s25 = scalar_select %p22, %s23, %s24
      %p28 = pneg %p22
      %p29 = scmp.eq.s32.totalorder %s13, 1
      %p30 = por %p28, %p29
      %p31 = scmp.ne.s32.totalorder %s23, %s26
      %p32 = scmp.eq.s32.totalorder %s13, 0
      %p33 = por %p31, %p32
      %p34 = scmp.ne.s32.totalorder %s23, %s26
      %p35 = scmp.eq.s32.totalorder %s18, 1
      %p36 = por %p34, %p35
      %p37 = scmp.ne.s32.totalorder %s26, %s27
      %p38 = scmp.eq.s32.totalorder %s18, 0
      %p39 = por %p37, %p38
      %p40 = scmp.ne.s32.totalorder %s26, %s27
      %p41 = scmp.eq.s32.totalorder %s19, 1
      %p42 = por %p40, %p41
      %p44 = scmp.ne.s32.totalorder %s27, %s43
      %p45 = scmp.eq.s32.totalorder %s19, 0
      %p46 = por %p44, %p45
      %s48 = sadd.s32 %s47, 1
      %p51 = scmp.eq.s32.totalorder %s13, 1
      %p52 = scmp.ne.s32.totalorder %s47, %s49
      %p53 = scmp.eq.s32.totalorder %s13, 0
      %p54 = por %p52, %p53
      %p55 = scmp.ne.s32.totalorder %s47, %s49
      %p56 = scmp.eq.s32.totalorder %s18, 1
      %p57 = por %p55, %p56
      %p58 = scmp.ne.s32.totalorder %s49, %s50
      %p59 = scmp.eq.s32.totalorder %s18, 0
      %p60 = por %p58, %p59
      %p61 = scmp.ne.s32.totalorder %s49, %s50
      %p62 = scmp.eq.s32.totalorder %s19, 1
      %p63 = por %p61, %p62
      %p65 = scmp.ne.s32.totalorder %s50, %s64
      %p66 = scmp.eq.s32.totalorder %s19, 0
      %p67 = por %p65, %p66
      %s69 = sadd.s32 %s68, 1
      %p72 = scmp.eq.s32.totalorder %s13, 1
      %p73 = scmp.ne.s32.totalorder %s68, %s70
      %p74 = scmp.eq.s32.totalorder %s13, 0
      %p75 = por %p73, %p74
      %p76 = scmp.ne.s32.totalorder %s68, %s70
      %p77 = scmp.eq.s32.totalorder %s18, 1
      %p78 = por %p76, %p77
      %p79 = scmp.ne.s32.totalorder %s70, %s71
      %p80 = scmp.eq.s32.totalorder %s18, 0
      %p81 = por %p79, %p80
      %p82 = scmp.ne.s32.totalorder %s70, %s71
      %p83 = scmp.eq.s32.totalorder %s19, 1
      %p84 = por %p82, %p83
      %p86 = scmp.ne.s32.totalorder %s71, %s85
      %p87 = scmp.eq.s32.totalorder %s19, 0
      %p88 = por %p86, %p87
      %s89 = ssub.s32 %s13, %s20
      %p90 = scmp.eq.s32.totalorder %s89, 0
      %s92 = sadd.s32 %s91, 1
      %s93 = scalar_select %p90, %s91, %s92
      %p96 = pneg %p90
      %p97 = scmp.eq.s32.totalorder %s13, 1
      %p98 = por %p96, %p97
      %p99 = scmp.ne.s32.totalorder %s91, %s94
      %p100 = scmp.eq.s32.totalorder %s13, 0
      %p101 = por %p99, %p100
      %p102 = scmp.ne.s32.totalorder %s91, %s94
      %p103 = scmp.eq.s32.totalorder %s18, 1
      %p104 = por %p102, %p103
      %p105 = scmp.ne.s32.totalorder %s94, %s95
      %p106 = scmp.eq.s32.totalorder %s18, 0
      %p107 = por %p105, %p106
      %p108 = scmp.ne.s32.totalorder %s94, %s95
      %p109 = scmp.eq.s32.totalorder %s19, 1
      %p110 = por %p108, %p109
      %p112 = scmp.ne.s32.totalorder %s95, %s111
      %p113 = scmp.eq.s32.totalorder %s19, 0
      %p114 = por %p112, %p113
      %p115 = scmp.le.s32.totalorder 1, %s13
      %p116 = scmp.lt.s32.totalorder %s13, 3
      %p117 = pnand %p115, %p116
      %p118 = pneg %p117
      // Predicated region
      $region9: #{tpu_custom_call.1} parent=5 // pred_check
        _
      $region10: #{tpu_custom_call.1} parent=5 // pred_check_branch
        %120 = sbr.rel (%p117) target = $region12
      $region11: #{tpu_custom_call.1} parent=5 // pred_region
        %s121 = ssub.s32 %s13, 1
        // Predicated region
        $region13: #{tpu_custom_call.1} parent=11 // pred_check
          %p122 = pneg %p60
        $region14: #{tpu_custom_call.1} parent=11 // pred_check_branch
          %124 = sbr.rel (%p122) target = $region16
        $region15: #{tpu_custom_call.1} parent=11 // pred_region
          %s126 = ssub.s32 2048, 2048
          %127 = vsyncadd [#allocation3], %s126
          %s128 = sshll.u32 [#allocation2], 4
          %s129 = int_to_ptr.vmem [resolvable:$true] %s128
          %134 = dma.hbm_to_vmem [thread:$0]  %s1, 2048, %s129, [#allocation3], 128, 128, 8
        $region16: #{tpu_custom_call.1} parent=11 // pred_fallthru
          _
        // Predicated region
        $region17: #{tpu_custom_call.1} parent=11 // pred_check
          %p135 = pneg %p81
        $region18: #{tpu_custom_call.1} parent=11 // pred_check_branch
          %137 = sbr.rel (%p135) target = $region20
        $region19: #{tpu_custom_call.1} parent=11 // pred_region
          _
        $region20: #{tpu_custom_call.1} parent=11 // pred_fallthru
          _
      $region12: #{tpu_custom_call.1} parent=5 // pred_fallthru
        _
      %p138 = scmp.lt.s32.totalorder %s13, 2
      // Predicated region
      $region21: #{tpu_custom_call.1} parent=5 // pred_check
        %p139 = pneg %p138
      $region22: #{tpu_custom_call.1} parent=5 // pred_check_branch
        %141 = sbr.rel (%p139) target = $region24
      $region23: #{tpu_custom_call.1} parent=5 // pred_region
        // Predicated region
        $region25: #{tpu_custom_call.1} parent=23 // pred_check
          %p142 = pneg %p33
        $region26: #{tpu_custom_call.1} parent=23 // pred_check_branch
          %144 = sbr.rel (%p142) target = $region28
        $region27: #{tpu_custom_call.1} parent=23 // pred_region
          %s145 = smul.u32 2, %s13
          %p146 = scmp.lt.s32.totalorder %s145, 3
          %s147 = scalar_select %p146, %s145, 3
          %s148 = smul.addr %s147, 8
          %s149 = scalar_lea.vmem %s0, %s148
          %s150 = smul.u32 2, %s13
        $region28: #{tpu_custom_call.1} parent=23 // pred_fallthru
          _
      $region24: #{tpu_custom_call.1} parent=5 // pred_fallthru
        _
      %p151 = scmp.le.s32.totalorder 1, %s13
      %p152 = scmp.lt.s32.totalorder %s13, 3
      %p153 = pnand %p151, %p152
      %p154 = pneg %p153
      // Predicated region
      $region29: #{tpu_custom_call.1} parent=5 // pred_check
        _
      $region30: #{tpu_custom_call.1} parent=5 // pred_check_branch
        %156 = sbr.rel (%p153) target = $region32
      $region31: #{tpu_custom_call.1} parent=5 // pred_region
        %s157 = ssub.s32 %s13, 1
        // Predicated region
        $region33: #{tpu_custom_call.1} parent=31 // pred_check
          %p158 = pneg %p60
        $region34: #{tpu_custom_call.1} parent=31 // pred_check_branch
          %160 = sbr.rel (%p158) target = $region36
        $region35: #{tpu_custom_call.1} parent=31 // pred_region
          %161 = dma.done [#allocation3], 2048
        $region36: #{tpu_custom_call.1} parent=31 // pred_fallthru
          _
        %s162 = smul.u32 2, %s18
        %p163 = scmp.lt.s32.totalorder %s162, 3
        %s164 = scalar_select %p163, %s162, 3
        %s165 = smul.addr %s164, 8
        %s166 = scalar_lea.vmem %s0, %s165
        %p167 = pneg %p39
        %p168 = pneg %p36
        %p169 = pneg %p60
        %p170 = pneg %p57
        %p171 = pneg %p81
        %p172 = pneg %p78
        %p173 = pneg %p107
        %p174 = pneg %p104
        %s175 = sand.u32 %s94, 1
        %s176 = scalar_lea.sflag [#allocation4], %s175
        %s177 = sand.u32 %s94, 1
        %s178 = smul.addr %s177, 32
        %s179 = scalar_lea.vmem [#allocation5], %s178
        %s180 = smul.u32 2, %s18
        %p181 = scmp.lt.s32.totalorder %s180, 3
        %s182 = scalar_select %p181, %s180, 3
        %s183 = smul.addr %s182, 8
        %s184 = scalar_lea.vmem %s0, %s183
        %s185 = smul.u32 2, %s18
        %s186 = smul.u32 2, %s18
        %v188 = vld [vmem:[%s184] sm:$0xff]
        %v189 = vld [vmem:[%s184 + $0x8] sm:$0xff]
        %v190 = vlaneseq
        %v191 = vand.u32 %v190, 127
        %192 = vset.pattern.permute.xlu0 0
        %193 = vperm.xlu0 %192, %v188
        %v194 = vpop.permute.xlu0 %193
        %195 = vset.pattern.permute.xlu0 0
        %196 = vperm.xlu0 %195, %v189
        %v197 = vpop.permute.xlu0 %196
        %vm198 = vcmp.eq.s32.totalorder %v191, %v194
        %vm199 = vcmp.eq.s32.totalorder %v191, %v197
        %v200 = vsel %vm198, 1.0, 0.0
        %v201 = vsel %vm199, 1.0, 0.0
        %v202 = vpack.c.bf16 %v201, %v200
        %v203 = vld [vmem:[#allocation2] sm:$0xff]
        %v204 = vld [vmem:[#allocation2 + $0x8] sm:$0xff]
        %v205 = vld [vmem:[#allocation2 + $0x10] sm:$0xff]
        %v206 = vld [vmem:[#allocation2 + $0x18] sm:$0xff]
        %v207 = vld [vmem:[#allocation2 + $0x20] sm:$0xff]
        %v208 = vld [vmem:[#allocation2 + $0x28] sm:$0xff]
        %v209 = vld [vmem:[#allocation2 + $0x30] sm:$0xff]
        %v210 = vld [vmem:[#allocation2 + $0x38] sm:$0xff]
        %v211 = vld [vmem:[#allocation2 + $0x40] sm:$0xff]
        %v212 = vld [vmem:[#allocation2 + $0x48] sm:$0xff]
        %v213 = vld [vmem:[#allocation2 + $0x50] sm:$0xff]
        %v214 = vld [vmem:[#allocation2 + $0x58] sm:$0xff]
        %v215 = vld [vmem:[#allocation2 + $0x60] sm:$0xff]
        %v216 = vld [vmem:[#allocation2 + $0x68] sm:$0xff]
        %v217 = vld [vmem:[#allocation2 + $0x70] sm:$0xff]
        %v218 = vld [vmem:[#allocation2 + $0x78] sm:$0xff]
        %v219 = vld [vmem:[%s2] sm:$0xff]
        %v220 = vld [vmem:[%s2 + $0x8] sm:$0xff]
        %v221 = vld [vmem:[%s2 + $0x10] sm:$0xff]
        %v222 = vld [vmem:[%s2 + $0x18] sm:$0xff]
        %v239 = vunpack.c.l.b16 %v203
        %v240 = vunpack.c.h.b16 %v203
        %v241 = vunpack.c.l.b16 %v204
        %v242 = vunpack.c.h.b16 %v204
        %v243 = vunpack.c.l.b16 %v205
        %v244 = vunpack.c.h.b16 %v205
        %v245 = vunpack.c.l.b16 %v206
        %v246 = vunpack.c.h.b16 %v206
        %v247 = vunpack.c.l.b16 %v207
        %v248 = vunpack.c.h.b16 %v207
        %v249 = vunpack.c.l.b16 %v208
        %v250 = vunpack.c.h.b16 %v208
        %v251 = vunpack.c.l.b16 %v209
        %v252 = vunpack.c.h.b16 %v209
        %v253 = vunpack.c.l.b16 %v210
        %v254 = vunpack.c.h.b16 %v210
        %v255 = vunpack.c.l.b16 %v211
        %v256 = vunpack.c.h.b16 %v211
        %v257 = vunpack.c.l.b16 %v212
        %v258 = vunpack.c.h.b16 %v212
        %v259 = vunpack.c.l.b16 %v213
        %v260 = vunpack.c.h.b16 %v213
        %v261 = vunpack.c.l.b16 %v214
        %v262 = vunpack.c.h.b16 %v214
        %v263 = vunpack.c.l.b16 %v215
        %v264 = vunpack.c.h.b16 %v215
        %v265 = vunpack.c.l.b16 %v216
        %v266 = vunpack.c.h.b16 %v216
        %v267 = vunpack.c.l.b16 %v217
        %v268 = vunpack.c.h.b16 %v217
        %v269 = vunpack.c.l.b16 %v218
        %v270 = vunpack.c.h.b16 %v218
        %v271 = vpack.c.b16 %v241, %v239
        %v272 = vpack.c.b16 %v242, %v240
        %v273 = vpack.c.b16 %v245, %v243
        %v274 = vpack.c.b16 %v246, %v244
        %v275 = vpack.c.b16 %v249, %v247
        %v276 = vpack.c.b16 %v250, %v248
        %v277 = vpack.c.b16 %v253, %v251
        %v278 = vpack.c.b16 %v254, %v252
        %v279 = vpack.c.b16 %v257, %v255
        %v280 = vpack.c.b16 %v258, %v256
        %v281 = vpack.c.b16 %v261, %v259
        %v282 = vpack.c.b16 %v262, %v260
        %v283 = vpack.c.b16 %v265, %v263
        %v284 = vpack.c.b16 %v266, %v264
        %v285 = vpack.c.b16 %v269, %v267
        %v286 = vpack.c.b16 %v270, %v268
        %303 = vmatprep.subr.bf16.mxu0 %v272
        %304 = vmatpush1.bf16.msra.mxu0 %v271
        %305 = vmatprep.subr.bf16.mxu0 %v274
        %306 = vmatpush1.bf16.msra.mxu0 %v273
        %307 = vmatprep.subr.bf16.mxu0 %v276
        %308 = vmatpush1.bf16.msra.mxu0 %v275
        %309 = vmatprep.subr.bf16.mxu0 %v278
        %310 = vmatpush1.bf16.msra.mxu0 %v277
        %311 = vmatprep.subr.bf16.mxu0 %v280
        %312 = vmatpush1.bf16.msra.mxu0 %v279
        %313 = vmatprep.subr.bf16.mxu0 %v282
        %314 = vmatpush1.bf16.msra.mxu0 %v281
        %315 = vmatprep.subr.bf16.mxu0 %v284
        %316 = vmatpush1.bf16.msra.mxu0 %v283
        %317 = vmatprep.subr.bf16.mxu0 %v286
        %318 = vmatpush1.bf16.msra.mxu0 %v285
        %319 = vmatprep.subr.bf16.mxu0 0
        %320 = vmatpush1.bf16.msra.mxu0 0
        %321 = vmatprep.subr.bf16.mxu0 0
        %322 = vmatpush1.bf16.msra.mxu0 0
        %323 = vmatprep.subr.bf16.mxu0 0
        %324 = vmatpush1.bf16.msra.mxu0 0
        %325 = vmatprep.subr.bf16.mxu0 0
        %326 = vmatpush1.bf16.msra.mxu0 0
        %327 = vmatprep.subr.bf16.mxu0 0
        %328 = vmatpush1.bf16.msra.mxu0 0
        %329 = vmatprep.subr.bf16.mxu0 0
        %330 = vmatpush1.bf16.msra.mxu0 0
        %331 = vmatprep.subr.bf16.mxu0 0
        %332 = vmatpush1.bf16.msra.mxu0 0
        %333 = vmatprep.subr.bf16.mxu0 0
        %334 = vmatpush1.bf16.msra.mxu0 0
        %335 = vmatprep.mubr.bf16.mxu0 0
        %336 = vmatmul.mubr.bf16.gmra.mrb[0].mxu0 %v202
        %v337 = vpop.f32.mrb[0].mxu0
        %v338 = vadd.f32 %v219, %v337
        %v339 = vpop.f32.mrb[0].mxu0
        %v340 = vadd.f32 %v220, %v339
        %v341 = vpop.f32.mrb[0].mxu0
        %v342 = vadd.f32 %v221, %v341
        %v343 = vpop.f32.mrb[0].mxu0
        %v344 = vadd.f32 %v222, %v343
        %345 = vdwg.mxu0
        %346 = vst [vmem:[%s179] sm:$0xff] %v338
        %347 = vst [vmem:[%s179 + $0x8] sm:$0xff] %v340
        %348 = vst [vmem:[%s179 + $0x10] sm:$0xff] %v342
        %349 = vst [vmem:[%s179 + $0x18] sm:$0xff] %v344
        %s350 = sand.u32 %s94, 1
        %s351 = scalar_lea.sflag [#allocation4], %s350
        %s352 = sand.u32 %s94, 1
        %s353 = smul.addr %s352, 32
        %s354 = scalar_lea.vmem [#allocation5], %s353
        // Predicated region
        $region37: #{tpu_custom_call.1} parent=31 // pred_check
          %p355 = pneg %p104
        $region38: #{tpu_custom_call.1} parent=31 // pred_check_branch
          %357 = sbr.rel (%p355) target = $region40
        $region39: #{tpu_custom_call.1} parent=31 // pred_region
          %s358 = smul.u32 2, %s18
          %s360 = ssub.s32 512, 512
          %361 = vsyncadd %s351, %s360
          %s362 = smul.addr %s358, 2
          %s363 = smul.addr %s362, 128
          %s364 = scalar_lea.hbm %s3, %s363
          %s365 = sshll.u32 %s354, 4
          %s366 = int_to_ptr.vmem [resolvable:$true] %s365
          %371 = dma.vmem_to_hbm [thread:$0]  %s366, 512, %s364, %s351, 256, 256, 16
        $region40: #{tpu_custom_call.1} parent=31 // pred_fallthru
          _
      $region32: #{tpu_custom_call.1} parent=5 // pred_fallthru
        _
      %p372 = scmp.le.s32.totalorder 2, %s13
      // Predicated region
      $region41: #{tpu_custom_call.1} parent=5 // pred_check
        %p373 = pneg %p372
      $region42: #{tpu_custom_call.1} parent=5 // pred_check_branch
        %375 = sbr.rel (%p373) target = $region44
      $region43: #{tpu_custom_call.1} parent=5 // pred_region
        %s376 = ssub.s32 %s13, 2
        // Predicated region
        $region45: #{tpu_custom_call.1} parent=43 // pred_check
          %p377 = pneg %p110
        $region46: #{tpu_custom_call.1} parent=43 // pred_check_branch
          %379 = sbr.rel (%p377) target = $region48
        $region47: #{tpu_custom_call.1} parent=43 // pred_region
          %s380 = sand.u32 %s95, 1
          %s381 = scalar_lea.sflag [#allocation4], %s380
          %s382 = sand.u32 %s95, 1
          %s383 = smul.addr %s382, 32
          %s384 = scalar_lea.vmem [#allocation5], %s383
          %385 = dma.done %s381, 512
        $region48: #{tpu_custom_call.1} parent=43 // pred_fallthru
          _
      $region44: #{tpu_custom_call.1} parent=5 // pred_fallthru
        _
    $region6: #{tpu_custom_call.1} parent=1 // loop_footer
      %s17 = sadd.s32 1, %s13
    $region7: #{tpu_custom_call.1} parent=1 // loop_footer_branch
      %12 = sbr.rel target = $region3
    $region8: #{tpu_custom_call.1} parent=1 // loop_exit
      _
    %386 = vsyncpa [#allocation3], 1
    %s387 = scalar_lea.sflag [#allocation3], 1
    %388 = vsyncpa %s387, 1
    %389 = vsyncpa [#allocation4], 1
    %s390 = scalar_lea.sflag [#allocation4], 1
    %391 = vsyncpa %s390, 1

</llo_original>
